<compile_context>
chip_gen: v5e
topology: v5e:2x2
jax: 0.10.0
libtpu: 0.0.40
codegen_flags: <defaults>
</compile_context>

<pallas_src>
import functools

import jax
import jax.numpy as jnp
from jax.experimental import pallas as pl
from jax.experimental.pallas import tpu as pltpu

K_PAD = 128    # padded input-feature width  (>= input_window*input_size + 1)
H_PAD = 128    # padded hidden width         (>= hidden_size + 1)
OUT_PAD = 128  # lane-dense output width (real output lives in column 0)


def _mlp3_kernel(x_ref, p_ref, o_ref):
    # x_ref: (Bt, K_PAD) activations; lane `in_feat` holds 1.0 (bias fold).
    # p_ref: (K_PAD + H_PAD + 8, H_PAD) packed parameter slab:
    #   rows [0, K_PAD)           -> W1 (bias row folded in, + ones-lane prop)
    #   rows [K_PAD, K_PAD+H_PAD) -> W2 (same folding)
    #   row  K_PAD + H_PAD        -> [w3 ; b3] vector for the VPU/XLU layer 3
    w1 = p_ref[0:K_PAD, :]                              # (K_PAD, H_PAD)
    w2 = p_ref[K_PAD:K_PAD + H_PAD, :]                  # (H_PAD, H_PAD)
    w3 = p_ref[K_PAD + H_PAD:K_PAD + H_PAD + 1, :]      # (1, H_PAD)

    x = x_ref[...]
    h = jnp.maximum(jnp.dot(x, w1, preferred_element_type=jnp.float32), 0.0)
    h = jnp.maximum(jnp.dot(h, w2, preferred_element_type=jnp.float32), 0.0)
    # Layer 3 (hidden -> 1) off the MXU: elementwise mul + lane reduction.
    y = jnp.sum(h * w3, axis=-1, keepdims=True)         # (Bt, 1)
    # Lane-dense store (full-vreg unmasked vst); wrapper slices column 0.
    o_ref[...] = jnp.broadcast_to(y, o_ref.shape)


def _pack_params(params, in_feat):
    """Pack (w1,b1,w2,b2,w3,b3) into one padded slab with biases folded in."""
    w1, b1, w2, b2, w3, b3 = params
    hidden = w1.shape[1]
    out_size = w3.shape[1]
    assert out_size == 1, "VPU layer-3 path assumes output_size == 1"
    assert in_feat + 1 <= K_PAD and hidden + 1 <= H_PAD

    rows = K_PAD + H_PAD + 8  # trailing pad keeps the slab sublane-aligned
    p = jnp.zeros((rows, H_PAD), jnp.float32)
    # Layer 1: x_aug @ W1_aug -> cols[:hidden] = x@w1 + b1, col[hidden] = 1.
    p = p.at[:in_feat, :hidden].set(w1)
    p = p.at[in_feat, :hidden].set(b1)
    p = p.at[in_feat, hidden].set(1.0)            # propagate the ones lane
    # Layer 2: same folding.
    p = p.at[K_PAD:K_PAD + hidden, :hidden].set(w2)
    p = p.at[K_PAD + hidden, :hidden].set(b2)
    p = p.at[K_PAD + hidden, hidden].set(1.0)     # propagate the ones lane
    # Layer 3 as a single vector: [w3 ; b3] (consumed by the lane reduction).
    p = p.at[K_PAD + H_PAD, :hidden].set(w3[:, 0])
    p = p.at[K_PAD + H_PAD, hidden].set(b3[0])
    return p


@functools.partial(jax.jit, static_argnames=("batch_block",))
def mlp3_forward(x, params, *, batch_block=1024):
    """x: (B, input_window, input_size) f32 -> (B, output_size) f32."""
    w1, b1, w2, b2, w3, b3 = params
    B = x.shape[0]
    in_feat = x.shape[1] * x.shape[2]
    out_size = w3.shape[1]

    x_flat = x.reshape(B, in_feat)                # same as torch .view(B, -1)
    # Bias-fold "ones" lane, then zero-pad features to a full 128-lane tile.
    x_aug = jnp.concatenate([x_flat, jnp.ones((B, 1), x_flat.dtype)], axis=1)
    x_aug = jnp.pad(x_aug, ((0, 0), (0, K_PAD - in_feat - 1)))

    p_slab = _pack_params(params, in_feat)

    # Batch tiling: single block at small B; 8-aligned tiles + "parallel"
    # grid at large B (uses both v7x TensorCores). Params get a constant
    # index_map so they stay VMEM-resident across grid steps.
    if B <= batch_block:
        bt, b_pad = B, B
    else:
        bt = max(8, (min(batch_block, B) // 8) * 8)
        b_pad = pl.cdiv(B, bt) * bt
        x_aug = jnp.pad(x_aug, ((0, b_pad - B), (0, 0)))
    grid = (b_pad // bt,)

    out_padded = pl.pallas_call(
        _mlp3_kernel,
        out_shape=jax.ShapeDtypeStruct((b_pad, OUT_PAD), jnp.float32),
        grid=grid,
        in_specs=[
            pl.BlockSpec((bt, K_PAD), lambda i: (i, 0)),
            pl.BlockSpec(p_slab.shape, lambda i: (0, 0)),  # weights resident
        ],
        out_specs=pl.BlockSpec((bt, OUT_PAD), lambda i: (i, 0)),
        compiler_params=pltpu.CompilerParams(
            dimension_semantics=("parallel",)),
    )(x_aug, p_slab)

    return out_padded[:B, :out_size]


def init_params(key, input_size=10, input_window=7, hidden_size=32,
                output_size=1):
    """Deterministic synthetic init (PyTorch-Linear-style uniform ranges)."""
    in_feat = input_size * input_window
    ks = jax.random.split(key, 6)

    def lin(kw, kb, fan_in, fan_out):
        bound = 1.0 / jnp.sqrt(fan_in)
        w = jax.random.uniform(kw, (fan_in, fan_out), jnp.float32, -bound, bound)
        b = jax.random.uniform(kb, (fan_out,), jnp.float32, -bound, bound)
        return w, b

    w1, b1 = lin(ks[0], ks[1], in_feat, hidden_size)
    w2, b2 = lin(ks[2], ks[3], hidden_size, hidden_size)
    w3, b3 = lin(ks[4], ks[5], hidden_size, output_size)
    return (w1, b1, w2, b2, w3, b3)


def _reference_forward(x, params):
    """Pure-JAX reference for correctness check."""
    w1, b1, w2, b2, w3, b3 = params
    h = jnp.maximum(x.reshape(x.shape[0], -1) @ w1 + b1, 0.0)
    h = jnp.maximum(h @ w2 + b2, 0.0)
    return h @ w3 + b3


if __name__ == "__main__":
    key = jax.random.PRNGKey(0)
    k_param, k_x = jax.random.split(key)

    input_size, input_window, hidden_size, output_size = 10, 7, 32, 1
    batch = 8

    params = init_params(k_param, input_size, input_window, hidden_size,
                         output_size)
    x = jax.random.normal(k_x, (batch, input_window, input_size), jnp.float32)

    out = jax.block_until_ready(mlp3_forward(x, params))
    ref = _reference_forward(x, params)

    assert out.shape == (batch, output_size)
    assert jnp.allclose(out, ref, atol=1e-5, rtol=1e-5)

    print("KERNEL_OK")
</pallas_src>

<mosaic_0001>
module attributes {stable_mosaic.version = 11 : i64} {
  func.func @_mlp3_kernel(%arg0: i32, %arg1: memref<8x128xf32, #tpu.memory_space<vmem>>, %arg2: memref<264x128xf32, #tpu.memory_space<vmem>>, %arg3: memref<8x128xf32, #tpu.memory_space<vmem>>) attributes {dimension_semantics = [#tpu.dimension_semantics<parallel>], iteration_bounds = array<i64: 1>, scalar_prefetch = 0 : i64, scratch_operands = 0 : i64, tpu.core_type = #tpu.core_type<tc>, window_params = [{transform_indices = @transform_0, window_bounds = array<i64: 8, 128>}, {pipeline_mode = #tpu.pipeline_mode<synchronous>, transform_indices = @transform_1, window_bounds = array<i64: 264, 128>}, {transform_indices = @transform_2, window_bounds = array<i64: 8, 128>}]} {
    %c0 = arith.constant 0 : index
    %c0_0 = arith.constant 0 : index
    %0 = vector.load %arg2[%c0, %c0_0] : memref<264x128xf32, #tpu.memory_space<vmem>>, vector<128x128xf32>
    %c128 = arith.constant 128 : index
    %c0_1 = arith.constant 0 : index
    %1 = vector.load %arg2[%c128, %c0_1] : memref<264x128xf32, #tpu.memory_space<vmem>>, vector<128x128xf32>
    %c256 = arith.constant 256 : index
    %c0_2 = arith.constant 0 : index
    %2 = vector.load %arg2[%c256, %c0_2] : memref<264x128xf32, #tpu.memory_space<vmem>>, vector<1x128xf32>
    %c0_3 = arith.constant 0 : index
    %c0_4 = arith.constant 0 : index
    %3 = vector.load %arg1[%c0_3, %c0_4] : memref<8x128xf32, #tpu.memory_space<vmem>>, vector<8x128xf32>
    %cst = arith.constant dense<0.000000e+00> : vector<8x128xf32>
    %4 = tpu.matmul %3, %0, %cst {dimension_numbers = #tpu.dot_dimension_numbers<[1], [0], [0], [1], [0, 0, 1, 1], [], []>} : vector<8x128xf32>, vector<128x128xf32>, vector<8x128xf32> -> vector<8x128xf32>
    %cst_5 = arith.constant 0.000000e+00 : f32
    %5 = vector.broadcast %cst_5 : f32 to vector<8x128xf32>
    %6 = arith.maximumf %4, %5 : vector<8x128xf32>
    %cst_6 = arith.constant dense<0.000000e+00> : vector<8x128xf32>
    %7 = tpu.matmul %6, %1, %cst_6 {dimension_numbers = #tpu.dot_dimension_numbers<[1], [0], [0], [1], [0, 0, 1, 1], [], []>} : vector<8x128xf32>, vector<128x128xf32>, vector<8x128xf32> -> vector<8x128xf32>
    %cst_7 = arith.constant 0.000000e+00 : f32
    %8 = vector.broadcast %cst_7 : f32 to vector<8x128xf32>
    %9 = arith.maximumf %7, %8 : vector<8x128xf32>
    %10 = vector.broadcast %2 : vector<1x128xf32> to vector<8x128xf32>
    %11 = arith.mulf %9, %10 : vector<8x128xf32>
    %cst_8 = arith.constant dense<0.000000e+00> : vector<8xf32>
    %12 = vector.multi_reduction <add>, %11, %cst_8 [1] : vector<8x128xf32> to vector<8xf32>
    %13 = vector.shape_cast %12 : vector<8xf32> to vector<8x1xf32>
    %14 = vector.shape_cast %13 : vector<8x1xf32> to vector<8x1xf32>
    %15 = vector.broadcast %14 : vector<8x1xf32> to vector<8x128xf32>
    %c0_9 = arith.constant 0 : index
    %c0_10 = arith.constant 0 : index
    %16 = vector.load %arg3[%c0_9, %c0_10] : memref<8x128xf32, #tpu.memory_space<vmem>>, vector<8x128xf32>
    tpu.vector_store %arg3[%c0_9, %c0_10], %15 {strides = array<i32>} : memref<8x128xf32, #tpu.memory_space<vmem>>, vector<8x128xf32>,
    return
  }
  func.func @transform_0(%arg0: i32) -> (i32, i32) {
    %c0_i32 = arith.constant 0 : i32
    %c0_i32_0 = arith.constant 0 : i32
    return %arg0, %c0_i32 : i32, i32
  }
  func.func @transform_1(%arg0: i32) -> (i32, i32) {
    %c0_i32 = arith.constant 0 : i32
    %c0_i32_0 = arith.constant 0 : i32
    %c0_i32_1 = arith.constant 0 : i32
    return %c0_i32, %c0_i32_0 : i32, i32
  }
  func.func @transform_2(%arg0: i32) -> (i32, i32) {
    %c0_i32 = arith.constant 0 : i32
    %c0_i32_0 = arith.constant 0 : i32
    return %arg0, %c0_i32 : i32, i32
  }
}

</mosaic_0001>

<llo_original>
// kernel: mlp3_forward.1
$region0: #{mlp3_forward.1}
  #allocation0 [shape = 'u32[]', space=smem, size = 0x4, offset = 0x4, fixed_abs, tag = 'smem constant byte address 0x4 - core index']
  #allocation1 [shape = 'u32[72,128]{1,0:T(1,128)}', space=vmem, size = 0x9000, scoped, tag = 'internal scratch']
  %s0 = inlined_call_operand.vmem [shape: f32[8,128], index: 0, kind: input, shape index: {}]
  %s1 = inlined_call_operand.vmem [shape: f32[264,128], index: 1, kind: input, shape index: {}]
  %s2 = inlined_call_operand.vmem [shape: f32[8,128], index: 2, kind: output, shape index: {}]
  %s3 = sld [smem:[#allocation0]]
  $region18: #{mlp3_forward.1} parent=0
    _
  %s5 = ssub.s32 1, %s3
  %s6 = scalar_select 0, %s5, %s3
  // Predicated region
  $region2: #{mlp3_forward.1} parent=0 // pred_check
    _
  $region3: #{mlp3_forward.1} parent=0 // pred_check_branch
    %8 = sbr.rel (0) target = $region5
  $region4: #{mlp3_forward.1} parent=0 // pred_region
    _
  $region5: #{mlp3_forward.1} parent=0 // pred_fallthru
    _
  // Predicated region
  $region6: #{mlp3_forward.1} parent=0 // pred_check
    _
  $region7: #{mlp3_forward.1} parent=0 // pred_check_branch
    %10 = sbr.rel (0) target = $region9
  $region8: #{mlp3_forward.1} parent=0 // pred_region
    _
  $region9: #{mlp3_forward.1} parent=0 // pred_fallthru
    _
  %v11 = vld [vmem:[%s1] sm:$0xff]
  %v12 = vld [vmem:[%s1 + $0x8] sm:$0xff]
  %v13 = vld [vmem:[%s1 + $0x10] sm:$0xff]
  %v14 = vld [vmem:[%s1 + $0x18] sm:$0xff]
  %v15 = vld [vmem:[%s1 + $0x20] sm:$0xff]
  %v16 = vld [vmem:[%s1 + $0x28] sm:$0xff]
  %v17 = vld [vmem:[%s1 + $0x30] sm:$0xff]
  %v18 = vld [vmem:[%s1 + $0x38] sm:$0xff]
  %v19 = vld [vmem:[%s1 + $0x40] sm:$0xff]
  %v20 = vld [vmem:[%s1 + $0x48] sm:$0xff]
  %v21 = vld [vmem:[%s1 + $0x50] sm:$0xff]
  %v22 = vld [vmem:[%s1 + $0x58] sm:$0xff]
  %v23 = vld [vmem:[%s1 + $0x60] sm:$0xff]
  %v24 = vld [vmem:[%s1 + $0x68] sm:$0xff]
  %v25 = vld [vmem:[%s1 + $0x70] sm:$0xff]
  %v26 = vld [vmem:[%s1 + $0x78] sm:$0xff]
  %v27 = vld [vmem:[%s1 + $0x80] sm:$0xff]
  %v28 = vld [vmem:[%s1 + $0x88] sm:$0xff]
  %v29 = vld [vmem:[%s1 + $0x90] sm:$0xff]
  %v30 = vld [vmem:[%s1 + $0x98] sm:$0xff]
  %v31 = vld [vmem:[%s1 + $0xa0] sm:$0xff]
  %v32 = vld [vmem:[%s1 + $0xa8] sm:$0xff]
  %v33 = vld [vmem:[%s1 + $0xb0] sm:$0xff]
  %v34 = vld [vmem:[%s1 + $0xb8] sm:$0xff]
  %v35 = vld [vmem:[%s1 + $0xc0] sm:$0xff]
  %v36 = vld [vmem:[%s1 + $0xc8] sm:$0xff]
  %v37 = vld [vmem:[%s1 + $0xd0] sm:$0xff]
  %v38 = vld [vmem:[%s1 + $0xd8] sm:$0xff]
  %v39 = vld [vmem:[%s1 + $0xe0] sm:$0xff]
  %v40 = vld [vmem:[%s1 + $0xe8] sm:$0xff]
  %v41 = vld [vmem:[%s1 + $0xf0] sm:$0xff]
  %v42 = vld [vmem:[%s1 + $0xf8] sm:$0xff]
  %v43 = vld [vmem:[%s1 + $0x100] sm:$0x1]
  %v44 = vld [vmem:[%s0] sm:$0xff]
  %45 = vmatpush.msra.mxu0 %v26
  %46 = vmatpush.msra.mxu0 %v25
  %47 = vmatpush.msra.mxu0 %v24
  %48 = vmatpush.msra.mxu0 %v23
  %49 = vmatpush.msra.mxu0 %v22
  %50 = vmatpush.msra.mxu0 %v21
  %51 = vmatpush.msra.mxu0 %v20
  %52 = vmatpush.msra.mxu0 %v19
  %53 = vmatpush.msra.mxu0 %v18
  %54 = vmatpush.msra.mxu0 %v17
  %55 = vmatpush.msra.mxu0 %v16
  %56 = vmatpush.msra.mxu0 %v15
  %57 = vmatpush.msra.mxu0 %v14
  %58 = vmatpush.msra.mxu0 %v13
  %59 = vmatpush.msra.mxu0 %v12
  %60 = vmatpush.msra.mxu0 %v11
  %61 = vmatmul.f32.gmra.mxu0 %v44
  %v62 = vpop.f32.mrf.mxu0
  %v63 = vadd.f32 0.0, %v62
  %64 = vdwg.mxu0
  %v65 = vmax.f32 %v63, 0.0
  %66 = vmatpush.msra.mxu0 %v42
  %67 = vmatpush.msra.mxu0 %v41
  %68 = vmatpush.msra.mxu0 %v40
  %69 = vmatpush.msra.mxu0 %v39
  %70 = vmatpush.msra.mxu0 %v38
  %71 = vmatpush.msra.mxu0 %v37
  %72 = vmatpush.msra.mxu0 %v36
  %73 = vmatpush.msra.mxu0 %v35
  %74 = vmatpush.msra.mxu0 %v34
  %75 = vmatpush.msra.mxu0 %v33
  %76 = vmatpush.msra.mxu0 %v32
  %77 = vmatpush.msra.mxu0 %v31
  %78 = vmatpush.msra.mxu0 %v30
  %79 = vmatpush.msra.mxu0 %v29
  %80 = vmatpush.msra.mxu0 %v28
  %81 = vmatpush.msra.mxu0 %v27
  %82 = vmatmul.f32.gmra.mxu0 %v65
  %v83 = vpop.f32.mrf.mxu0
  %v84 = vadd.f32 0.0, %v83
  %85 = vdwg.mxu0
  %v86 = vmax.f32 %v84, 0.0
  %v87 = vperm.slane %v43, 0
  %v88 = vmul.f32 %v86, %v87
  %89 = vadd.xlane.f32.xlu0 %v88
  %v90 = vpop.xlane.xlu0 %89
  %91 = vst [vmem:[%s2] sm:$0xff] %v90
  // Predicated region
  $region10: #{mlp3_forward.1} parent=0 // pred_check
    _
  $region11: #{mlp3_forward.1} parent=0 // pred_check_branch
    %93 = sbr.rel (0) target = $region13
  $region12: #{mlp3_forward.1} parent=0 // pred_region
    _
  $region13: #{mlp3_forward.1} parent=0 // pred_fallthru
    _
  // Predicated region
  $region14: #{mlp3_forward.1} parent=0 // pred_check
    _
  $region15: #{mlp3_forward.1} parent=0 // pred_check_branch
    %95 = sbr.rel (0) target = $region17
  $region16: #{mlp3_forward.1} parent=0 // pred_region
    _
  $region17: #{mlp3_forward.1} parent=0 // pred_fallthru
    _

</llo_original>
